<compile_context>
chip_gen: v5e
topology: v5e:2x2
jax: 0.10.0
libtpu: 0.0.40
codegen_flags: <defaults>
</compile_context>

<pallas_src>
import jax
import jax.numpy as jnp
from jax.experimental import pallas as pl
from jax.experimental.pallas import tpu as pltpu

_LANE = 128


def _round_up(n, m):
    return ((n + m - 1) // m) * m


def _sublane(dtype):
    # Sub-32-bit dtypes pack along sublanes: 8 rows (f32), 16 (bf16), 32 (i8/fp8).
    return {4: 8, 2: 16, 1: 32}.get(jnp.dtype(dtype).itemsize, 8)


def double_linear_kernel(x_ref, w_ref, b_ref, o_ref):
    x = x_ref[...]
    if x.dtype != w_ref.dtype:          # keep the MXU at the weight dtype's peak
        x = x.astype(w_ref.dtype)
    y = jnp.dot(x, w_ref[...], preferred_element_type=jnp.float32)
    y = y + b_ref[...]                  # (1, out_p) broadcasts over rows, f32
    o_ref[...] = y.astype(o_ref.dtype)


def prepare_params(w1, b1, w2, b2, *, param_dtype=None):
    """One-time parameter prep (hoisted out of the per-call hot path).

    PyTorch stores W as (out, in).  Since the two linears are back-to-back
    with no nonlinearity and the weights are static, fold them:
        W_eff = W1^T @ W2^T      (in_features, out_features)
        b_eff = b1 @ W2^T + b2   (1, out_features)
    Both are zero-padded to 128-lane multiples so every kernel load/store is
    lane-dense.  Returns (w_eff, b_eff, out_features).
    """
    w1t = jnp.transpose(w1).astype(jnp.float32)       # (in_f, out_f)
    w2t = jnp.transpose(w2).astype(jnp.float32)       # (out_f, out_f)
    w_eff = jnp.dot(w1t, w2t, preferred_element_type=jnp.float32)
    b_eff = (jnp.dot(b1.astype(jnp.float32).reshape(1, -1), w2t,
                     preferred_element_type=jnp.float32)
             + b2.astype(jnp.float32).reshape(1, -1))

    in_f, out_f = w_eff.shape
    in_p = _round_up(in_f, _LANE)
    out_p = _round_up(out_f, _LANE)
    w_eff = jnp.pad(w_eff, ((0, in_p - in_f), (0, out_p - out_f)))
    b_eff = jnp.pad(b_eff, ((0, 0), (0, out_p - out_f)))

    if param_dtype is not None:
        # e.g. jnp.bfloat16 on v6e/v7x for MXU-peak weights (bias stays f32;
        # accumulation stays f32 via preferred_element_type).
        w_eff = w_eff.astype(param_dtype)
    return w_eff, b_eff, out_f


def double_linear(x, w_eff, b_eff, out_features=None, *, block_rows=512):
    """x: (B, in_features); w_eff: (in_p, out_p); b_eff: (1, out_p)."""
    B, in_f = x.shape
    in_p, out_p = w_eff.shape
    if out_features is None:
        out_features = out_p

    # Lane-pad x's feature dim to match the (already padded) W_eff rows.
    if in_f != in_p:
        x = jnp.pad(x, ((0, 0), (0, in_p - in_f)))

    # Balanced row tiles: avoid near-2x padding waste, dtype-correct sublanes.
    sub = _sublane(x.dtype)
    n_tiles = max(1, pl.cdiv(B, block_rows))
    # Give v7x's second TensorCore work when a second grid step is cheaper
    # than leaving a core idle (harmless single-TC chips just loop twice).
    if n_tiles == 1 and B >= 2 * max(sub, 128):
        n_tiles = 2
    tm = _round_up(pl.cdiv(B, n_tiles), sub)
    b_padded = _round_up(B, tm)
    if b_padded != B:
        x = jnp.pad(x, ((0, b_padded - B), (0, 0)))
    grid = (b_padded // tm,)

    # VMEM budget from the actual block footprint (x/out double-buffered,
    # weights+bias counted double-buffered for safety) + headroom, clamped
    # under v7x's 64 MiB physical VMEM (v5e/v6e have 128 MiB so this is safe).
    xb = jnp.dtype(x.dtype).itemsize
    wb = jnp.dtype(w_eff.dtype).itemsize
    bb = jnp.dtype(b_eff.dtype).itemsize
    footprint = (2 * tm * in_p * xb            # x tiles (double-buffered)
                 + 2 * tm * out_p * xb         # out tiles (double-buffered)
                 + 2 * (w_eff.size * wb + b_eff.size * bb))
    vmem_limit = min(max(int(1.5 * footprint) + (4 << 20), 32 << 20), 64 << 20)
    # NOTE: if the folded weight itself outgrows VMEM (very large feature
    # dims, esp. on v7x), add K/N grid tiling with an f32 accumulator (P3).

    flops = 2 * b_padded * in_p * out_p
    bytes_accessed = (b_padded * in_p * xb + w_eff.size * wb
                      + b_eff.size * bb + b_padded * out_p * xb)

    out = pl.pallas_call(
        double_linear_kernel,
        out_shape=jax.ShapeDtypeStruct((b_padded, out_p), x.dtype),
        grid_spec=pl.GridSpec(
            grid=grid,
            in_specs=[
                # x: one row-tile per grid step.
                pl.BlockSpec((tm, in_p), lambda i: (i, 0)),
                # Folded weight + bias: constant block index -> fetched once,
                # resident in VMEM across the whole grid.
                pl.BlockSpec((in_p, out_p), lambda i: (0, 0)),
                pl.BlockSpec((1, out_p), lambda i: (0, 0)),
            ],
            out_specs=pl.BlockSpec((tm, out_p), lambda i: (i, 0)),
        ),
        compiler_params=pltpu.CompilerParams(
            dimension_semantics=("parallel",),
            vmem_limit_bytes=vmem_limit,
        ),
        cost_estimate=pl.CostEstimate(
            flops=flops, transcendentals=0, bytes_accessed=bytes_accessed),
    )(x, w_eff, b_eff)

    # Slice off padded rows / lane-padding columns.
    return out[:B, :out_features]


if __name__ == "__main__":
    # Small shapes consistent with the module: batch=8, in_features=32, out_features=32.
    B, in_features, out_features = 8, 32, 32

    key = jax.random.PRNGKey(0)
    kx, kw1, kb1, kw2, kb2 = jax.random.split(key, 5)

    x = jax.random.normal(kx, (B, in_features), dtype=jnp.float32)

    # Deterministic params (PyTorch nn.Linear layout: W is (out, in), b is (out,)).
    bound1 = 1.0 / (in_features ** 0.5)
    w1 = jax.random.uniform(kw1, (out_features, in_features),
                            minval=-bound1, maxval=bound1, dtype=jnp.float32)
    b1 = jax.random.uniform(kb1, (out_features,),
                            minval=-bound1, maxval=bound1, dtype=jnp.float32)
    bound2 = 1.0 / (out_features ** 0.5)
    w2 = jax.random.uniform(kw2, (out_features, out_features),
                            minval=-bound2, maxval=bound2, dtype=jnp.float32)
    b2 = jax.random.uniform(kb2, (out_features,),
                            minval=-bound2, maxval=bound2, dtype=jnp.float32)

    # One-time fold + lane-padding (static inference params, out of hot path).
    params = prepare_params(w1, b1, w2, b2)

    y = double_linear(x, *params)
    y = jax.block_until_ready(y)

    # Pure-JAX two-matmul reference; tolerance covers the fold's reassociation.
    ref = (x @ w1.T + b1) @ w2.T + b2
    assert y.shape == ref.shape, (y.shape, ref.shape)
    assert jnp.allclose(y, ref, atol=1e-4, rtol=1e-4), "mismatch vs reference"

    print("KERNEL_OK")
</pallas_src>

<mosaic_0001>
module attributes {stable_mosaic.version = 11 : i64} {
  func.func @double_linear_kernel(%arg0: i32, %arg1: memref<8x128xf32, #tpu.memory_space<vmem>>, %arg2: memref<128x128xf32, #tpu.memory_space<vmem>>, %arg3: memref<1x128xf32, #tpu.memory_space<vmem>>, %arg4: memref<8x128xf32, #tpu.memory_space<vmem>>) attributes {dimension_semantics = [#tpu.dimension_semantics<parallel>], iteration_bounds = array<i64: 1>, scalar_prefetch = 0 : i64, scratch_operands = 0 : i64, tpu.core_type = #tpu.core_type<tc>, window_params = [{transform_indices = @transform_0, window_bounds = array<i64: 8, 128>}, {pipeline_mode = #tpu.pipeline_mode<synchronous>, transform_indices = @transform_1, window_bounds = array<i64: 128, 128>}, {pipeline_mode = #tpu.pipeline_mode<synchronous>, transform_indices = @transform_2, window_bounds = array<i64: 1, 128>}, {transform_indices = @transform_3, window_bounds = array<i64: 8, 128>}]} {
    %c0 = arith.constant 0 : index
    %c0_0 = arith.constant 0 : index
    %0 = vector.load %arg1[%c0, %c0_0] : memref<8x128xf32, #tpu.memory_space<vmem>>, vector<8x128xf32>
    %c0_1 = arith.constant 0 : index
    %c0_2 = arith.constant 0 : index
    %1 = vector.load %arg2[%c0_1, %c0_2] : memref<128x128xf32, #tpu.memory_space<vmem>>, vector<128x128xf32>
    %cst = arith.constant dense<0.000000e+00> : vector<8x128xf32>
    %2 = tpu.matmul %0, %1, %cst {dimension_numbers = #tpu.dot_dimension_numbers<[1], [0], [0], [1], [0, 0, 1, 1], [], []>} : vector<8x128xf32>, vector<128x128xf32>, vector<8x128xf32> -> vector<8x128xf32>
    %c0_3 = arith.constant 0 : index
    %c0_4 = arith.constant 0 : index
    %3 = vector.load %arg3[%c0_3, %c0_4] : memref<1x128xf32, #tpu.memory_space<vmem>>, vector<1x128xf32>
    %4 = vector.broadcast %3 : vector<1x128xf32> to vector<8x128xf32>
    %5 = arith.addf %2, %4 : vector<8x128xf32>
    %c0_5 = arith.constant 0 : index
    %c0_6 = arith.constant 0 : index
    %6 = vector.load %arg4[%c0_5, %c0_6] : memref<8x128xf32, #tpu.memory_space<vmem>>, vector<8x128xf32>
    tpu.vector_store %arg4[%c0_5, %c0_6], %5 {strides = array<i32>} : memref<8x128xf32, #tpu.memory_space<vmem>>, vector<8x128xf32>,
    return
  }
  func.func @transform_0(%arg0: i32) -> (i32, i32) {
    %c0_i32 = arith.constant 0 : i32
    %c0_i32_0 = arith.constant 0 : i32
    return %arg0, %c0_i32 : i32, i32
  }
  func.func @transform_1(%arg0: i32) -> (i32, i32) {
    %c0_i32 = arith.constant 0 : i32
    %c0_i32_0 = arith.constant 0 : i32
    %c0_i32_1 = arith.constant 0 : i32
    return %c0_i32, %c0_i32_0 : i32, i32
  }
  func.func @transform_2(%arg0: i32) -> (i32, i32) {
    %c0_i32 = arith.constant 0 : i32
    %c0_i32_0 = arith.constant 0 : i32
    %c0_i32_1 = arith.constant 0 : i32
    return %c0_i32, %c0_i32_0 : i32, i32
  }
  func.func @transform_3(%arg0: i32) -> (i32, i32) {
    %c0_i32 = arith.constant 0 : i32
    %c0_i32_0 = arith.constant 0 : i32
    return %arg0, %c0_i32 : i32, i32
  }
}

</mosaic_0001>

<llo_original>
// kernel: tpu_custom_call.1
$region0: #{tpu_custom_call.1}
  #allocation0 [shape = 'u32[]', space=smem, size = 0x4, offset = 0x4, fixed_abs, tag = 'smem constant byte address 0x4 - core index']
  #allocation1 [shape = 'u32[72,128]{1,0:T(1,128)}', space=vmem, size = 0x9000, scoped, tag = 'internal scratch']
  %s0 = inlined_call_operand.hbm [shape: f32[8,128], index: 0, kind: input, shape index: {}]
  %s1 = inlined_call_operand.hbm [shape: f32[128,128], index: 1, kind: input, shape index: {}]
  %s2 = inlined_call_operand.vmem [shape: f32[1,128], index: 2, kind: input, shape index: {}]
  %s3 = inlined_call_operand.hbm [shape: f32[8,128], index: 3, kind: output, shape index: {}]
  %s4 = sld [smem:[#allocation0]]
  $region30: #{tpu_custom_call.1} parent=0
    _
  %s6 = ssub.s32 1, %s4
  %s7 = scalar_select 0, %s6, %s4
  $region1: #{tpu_custom_call.1} parent=0
    #allocation2 [shape = 'u8[4096]{0}', space=vmem, size = 0x1000, scoped, tag = 'input window, operand 0, single buffered']
    #allocation3 [shape = 's32[1]{0}', space=sflag, size = 0x4, scoped, tag = 'scoped memory for tpu_custom_call.1']
    #allocation4 [shape = 's32[1]{0}', space=sflag, size = 0x4, scoped, tag = 'scoped memory for tpu_custom_call.1']
    #allocation5 [shape = 'u8[65536]{0}', space=vmem, size = 0x10000, scoped, tag = 'input window, operand 1, single buffered']
    #allocation6 [shape = 's32[1]{0}', space=sflag, size = 0x4, scoped, tag = 'scoped memory for tpu_custom_call.1']
    #allocation7 [shape = 'u8[4096]{0}', space=vmem, size = 0x1000, scoped, tag = 'output window, operand 0, single buffered']
    %8 = vsyncpa [#allocation3], 0
    %9 = vsyncpa [#allocation6], 0
    %10 = vsyncpa [#allocation4], 0
    // Predicated region
    $region2: #{tpu_custom_call.1} parent=1 // pred_check
      _
    $region3: #{tpu_custom_call.1} parent=1 // pred_check_branch
      %12 = sbr.rel (0) target = $region5
    $region4: #{tpu_custom_call.1} parent=1 // pred_region
      %14 = vsyncadd [#allocation3], 0
      %s16 = sshll.u32 %s0, 4
      %s17 = int_to_ptr.hbm [resolvable:$true] %s16
      %s18 = sshll.u32 [#allocation2], 4
      %s19 = int_to_ptr.vmem [resolvable:$true] %s18
      %21 = dma.hbm_to_vmem [thread:$0]  %s17, 128, %s19, [#allocation3]
    $region5: #{tpu_custom_call.1} parent=1 // pred_fallthru
      _
    // Predicated region
    $region6: #{tpu_custom_call.1} parent=1 // pred_check
      _
    $region7: #{tpu_custom_call.1} parent=1 // pred_check_branch
      %23 = sbr.rel (0) target = $region9
    $region8: #{tpu_custom_call.1} parent=1 // pred_region
      %25 = vsyncadd [#allocation6], 0
      %s26 = sshll.u32 %s1, 4
      %s27 = int_to_ptr.hbm [resolvable:$true] %s26
      %s28 = sshll.u32 [#allocation5], 4
      %s29 = int_to_ptr.vmem [resolvable:$true] %s28
      %34 = dma.hbm_to_vmem [thread:$0]  %s27, 2048, %s29, [#allocation6], 128, 128, 8
    $region9: #{tpu_custom_call.1} parent=1 // pred_fallthru
      _
    // Predicated region
    $region10: #{tpu_custom_call.1} parent=1 // pred_check
      _
    $region11: #{tpu_custom_call.1} parent=1 // pred_check_branch
      %36 = sbr.rel (0) target = $region13
    $region12: #{tpu_custom_call.1} parent=1 // pred_region
      _
    $region13: #{tpu_custom_call.1} parent=1 // pred_fallthru
      _
    // Predicated region
    $region14: #{tpu_custom_call.1} parent=1 // pred_check
      _
    $region15: #{tpu_custom_call.1} parent=1 // pred_check_branch
      %38 = sbr.rel (0) target = $region17
    $region16: #{tpu_custom_call.1} parent=1 // pred_region
      %40 = dma.done [#allocation3], 128
    $region17: #{tpu_custom_call.1} parent=1 // pred_fallthru
      _
    // Predicated region
    $region18: #{tpu_custom_call.1} parent=1 // pred_check
      _
    $region19: #{tpu_custom_call.1} parent=1 // pred_check_branch
      %42 = sbr.rel (0) target = $region21
    $region20: #{tpu_custom_call.1} parent=1 // pred_region
      %44 = dma.done [#allocation6], 2048
    $region21: #{tpu_custom_call.1} parent=1 // pred_fallthru
      _
    %v45 = vld [vmem:[#allocation2] sm:$0xff]
    %v46 = vld [vmem:[#allocation5] sm:$0xff]
    %v47 = vld [vmem:[#allocation5 + $0x8] sm:$0xff]
    %v48 = vld [vmem:[#allocation5 + $0x10] sm:$0xff]
    %v49 = vld [vmem:[#allocation5 + $0x18] sm:$0xff]
    %v50 = vld [vmem:[#allocation5 + $0x20] sm:$0xff]
    %v51 = vld [vmem:[#allocation5 + $0x28] sm:$0xff]
    %v52 = vld [vmem:[#allocation5 + $0x30] sm:$0xff]
    %v53 = vld [vmem:[#allocation5 + $0x38] sm:$0xff]
    %v54 = vld [vmem:[#allocation5 + $0x40] sm:$0xff]
    %v55 = vld [vmem:[#allocation5 + $0x48] sm:$0xff]
    %v56 = vld [vmem:[#allocation5 + $0x50] sm:$0xff]
    %v57 = vld [vmem:[#allocation5 + $0x58] sm:$0xff]
    %v58 = vld [vmem:[#allocation5 + $0x60] sm:$0xff]
    %v59 = vld [vmem:[#allocation5 + $0x68] sm:$0xff]
    %v60 = vld [vmem:[#allocation5 + $0x70] sm:$0xff]
    %v61 = vld [vmem:[#allocation5 + $0x78] sm:$0xff]
    %v62 = vld [vmem:[%s2] sm:$0x1]
    %v64 = vperm.slane %v62, 0
    %66 = vmatpush.msra.mxu0 %v61
    %67 = vmatpush.msra.mxu0 %v60
    %68 = vmatpush.msra.mxu0 %v59
    %69 = vmatpush.msra.mxu0 %v58
    %70 = vmatpush.msra.mxu0 %v57
    %71 = vmatpush.msra.mxu0 %v56
    %72 = vmatpush.msra.mxu0 %v55
    %73 = vmatpush.msra.mxu0 %v54
    %74 = vmatpush.msra.mxu0 %v53
    %75 = vmatpush.msra.mxu0 %v52
    %76 = vmatpush.msra.mxu0 %v51
    %77 = vmatpush.msra.mxu0 %v50
    %78 = vmatpush.msra.mxu0 %v49
    %79 = vmatpush.msra.mxu0 %v48
    %80 = vmatpush.msra.mxu0 %v47
    %81 = vmatpush.msra.mxu0 %v46
    %82 = vmatmul.f32.gmra.mxu0 %v45
    %v83 = vpop.f32.mrf.mxu0
    %v84 = vadd.f32 %v64, %v83
    %85 = vdwg.mxu0
    %86 = vst [vmem:[#allocation7] sm:$0xff] %v84
    // Predicated region
    $region22: #{tpu_custom_call.1} parent=1 // pred_check
      _
    $region23: #{tpu_custom_call.1} parent=1 // pred_check_branch
      %88 = sbr.rel (0) target = $region25
    $region24: #{tpu_custom_call.1} parent=1 // pred_region
      %90 = vsyncadd [#allocation4], 0
      %s92 = sshll.u32 [#allocation7], 4
      %s93 = int_to_ptr.vmem [resolvable:$true] %s92
      %s94 = sshll.u32 %s3, 4
      %s95 = int_to_ptr.hbm [resolvable:$true] %s94
      %97 = dma.vmem_to_hbm [thread:$0]  %s93, 128, %s95, [#allocation4]
    $region25: #{tpu_custom_call.1} parent=1 // pred_fallthru
      _
    // Predicated region
    $region26: #{tpu_custom_call.1} parent=1 // pred_check
      _
    $region27: #{tpu_custom_call.1} parent=1 // pred_check_branch
      %99 = sbr.rel (0) target = $region29
    $region28: #{tpu_custom_call.1} parent=1 // pred_region
      %101 = dma.done [#allocation4], 128
    $region29: #{tpu_custom_call.1} parent=1 // pred_fallthru
      _
    %102 = vsyncpa [#allocation3], 1
    %103 = vsyncpa [#allocation6], 1
    %104 = vsyncpa [#allocation4], 1

</llo_original>
